<compile_context>
chip_gen: v6e
topology: v6e:2x2x1
jax: 0.10.0
libtpu: 0.0.40
codegen_flags: <defaults>
</compile_context>

<pallas_src>
import functools

import jax
import jax.numpy as jnp
from jax.experimental import pallas as pl
from jax.experimental.pallas import tpu as pltpu


def gnet_kernel(x_ref, c_ref, o_ref):
    """One grid step over the batch axis.

    x_ref: (tile_n, D) slice of the input rows
    c_ref: (tile_n, 1) per-row coefficients (+1/half, -1/(N-half), 0 for pad)
    o_ref: (1, D) f32 output, resident across the grid (accumulator), holds
           sigmoid(x_s - x_t) after the last step.
    """
    @pl.when(pl.program_id(0) == 0)
    def _():
        o_ref[...] = jnp.zeros_like(o_ref)

    x = x_ref[...].astype(jnp.float32)            # (tile_n, D)
    c = c_ref[...].astype(jnp.float32)            # (tile_n, 1)
    # fused "mean(first half) - mean(second half)": one sublane reduction
    o_ref[...] += jnp.sum(c * x, axis=0, keepdims=True)

    @pl.when(pl.program_id(0) == pl.num_programs(0) - 1)
    def _():
        xd = o_ref[...]
        o_ref[...] = 1.0 / (1.0 + jnp.exp(-xd))   # sigmoid(x_s - x_t)


@functools.partial(jax.jit, static_argnames=("tile_n",))
def gnet_forward(x, *, tile_n=1024):
    """sigmoid(mean(x[:N//2],0,keepdim) - mean(x[N//2:],0,keepdim)) -> (1, D)."""
    N, D = x.shape
    half = N // 2

    # Per-row reduction coefficients (tiny: N x 1 f32), built on host side.
    coeff = jnp.concatenate(
        [jnp.full((half, 1), 1.0 / half, jnp.float32),
         jnp.full((N - half, 1), -1.0 / (N - half), jnp.float32)],
        axis=0)

    # Batch tile: multiple of 8 (sublane), capped at tile_n; pad with zero
    # rows / zero coeffs so padded rows contribute nothing.
    tn = min(tile_n, ((N + 7) // 8) * 8)
    n_pad = pl.cdiv(N, tn) * tn
    if n_pad != N:
        x = jnp.pad(x, ((0, n_pad - N), (0, 0)))
        coeff = jnp.pad(coeff, ((0, n_pad - N), (0, 0)))

    grid = (n_pad // tn,)
    return pl.pallas_call(
        gnet_kernel,
        out_shape=jax.ShapeDtypeStruct((1, D), jnp.float32),
        grid=grid,
        in_specs=[
            pl.BlockSpec((tn, D), lambda i: (i, 0)),   # x rows
            pl.BlockSpec((tn, 1), lambda i: (i, 0)),   # per-row coefficients
        ],
        out_specs=pl.BlockSpec((1, D), lambda i: (0, 0)),  # resident accumulator
        compiler_params=pltpu.CompilerParams(
            dimension_semantics=("arbitrary",)),       # grid axis is a reduction
    )(x, coeff)
    # NOTE: hidden/out MLP of the PyTorch module is dead code (its result is
    # overwritten by sigmoid(x)), so it is intentionally not executed here.


if __name__ == "__main__":
    key = jax.random.PRNGKey(0)
    N, D = 8, 32                       # batch, n_input (n_hiddens/MLP are dead code)
    x = jax.random.normal(key, (N, D), jnp.float32)

    out = jax.block_until_ready(gnet_forward(x))

    # Pure-JAX reference of the exact PyTorch forward semantics.
    x_s = jnp.mean(x[: N // 2], axis=0, keepdims=True)
    x_t = jnp.mean(x[N // 2:], axis=0, keepdims=True)
    ref = jax.nn.sigmoid(x_s - x_t)

    assert out.shape == (1, D), out.shape
    assert jnp.allclose(out, ref, atol=1e-5, rtol=1e-5), "mismatch vs reference"
    print("KERNEL_OK")
</pallas_src>

<mosaic_0001>
module attributes {stable_mosaic.version = 11 : i64} {
  func.func @gnet_kernel(%arg0: i32, %arg1: memref<8x32xf32, #tpu.memory_space<vmem>>, %arg2: memref<8x1xf32, #tpu.memory_space<vmem>>, %arg3: memref<1x32xf32, #tpu.memory_space<vmem>>) attributes {dimension_semantics = [#tpu.dimension_semantics<arbitrary>], iteration_bounds = array<i64: 1>, scalar_prefetch = 0 : i64, scratch_operands = 0 : i64, tpu.core_type = #tpu.core_type<tc>, window_params = [{transform_indices = @transform_0, window_bounds = array<i64: 8, 32>}, {transform_indices = @transform_1, window_bounds = array<i64: 8, 1>}, {pipeline_mode = #tpu.pipeline_mode<synchronous>, transform_indices = @transform_2, window_bounds = array<i64: 1, 32>}]} {
    %c0_i32 = arith.constant 0 : i32
    %0 = arith.cmpi eq, %arg0, %c0_i32 : i32
    %1 = arith.extui %0 : i1 to i32
    %c0_i32_0 = arith.constant 0 : i32
    %2 = arith.cmpi ne, %1, %c0_i32_0 : i32
    scf.if %2 {
      %cst_10 = arith.constant 0.000000e+00 : f32
      %15 = vector.broadcast %cst_10 : f32 to vector<1x32xf32>
      %c0_11 = arith.constant 0 : index
      %c0_12 = arith.constant 0 : index
      %16 = vector.load %arg3[%c0_11, %c0_12] : memref<1x32xf32, #tpu.memory_space<vmem>>, vector<1x32xf32>
      tpu.vector_store %arg3[%c0_11, %c0_12], %15 {strides = array<i32>} : memref<1x32xf32, #tpu.memory_space<vmem>>, vector<1x32xf32>,
    } else {
    }
    %c0 = arith.constant 0 : index
    %c0_1 = arith.constant 0 : index
    %3 = vector.load %arg1[%c0, %c0_1] : memref<8x32xf32, #tpu.memory_space<vmem>>, vector<8x32xf32>
    %c0_2 = arith.constant 0 : index
    %c0_3 = arith.constant 0 : index
    %4 = vector.load %arg2[%c0_2, %c0_3] : memref<8x1xf32, #tpu.memory_space<vmem>>, vector<8x1xf32>
    %c0_4 = arith.constant 0 : index
    %c0_5 = arith.constant 0 : index
    %5 = vector.load %arg3[%c0_4, %c0_5] : memref<1x32xf32, #tpu.memory_space<vmem>>, vector<1x32xf32>
    %6 = vector.broadcast %4 : vector<8x1xf32> to vector<8x32xf32>
    %7 = arith.mulf %6, %3 : vector<8x32xf32>
    %cst = arith.constant dense<0.000000e+00> : vector<32xf32>
    %8 = vector.multi_reduction <add>, %7, %cst [0] : vector<8x32xf32> to vector<32xf32>
    %9 = vector.shape_cast %8 : vector<32xf32> to vector<1x32xf32>
    %10 = arith.addf %5, %9 : vector<1x32xf32>
    %c0_6 = arith.constant 0 : index
    %c0_7 = arith.constant 0 : index
    %11 = vector.load %arg3[%c0_6, %c0_7] : memref<1x32xf32, #tpu.memory_space<vmem>>, vector<1x32xf32>
    tpu.vector_store %arg3[%c0_6, %c0_7], %10 {strides = array<i32>} : memref<1x32xf32, #tpu.memory_space<vmem>>, vector<1x32xf32>,
    %c0_i32_8 = arith.constant 0 : i32
    %12 = arith.cmpi eq, %arg0, %c0_i32_8 : i32
    %13 = arith.extui %12 : i1 to i32
    %c0_i32_9 = arith.constant 0 : i32
    %14 = arith.cmpi ne, %13, %c0_i32_9 : i32
    scf.if %14 {
      %c0_10 = arith.constant 0 : index
      %c0_11 = arith.constant 0 : index
      %15 = vector.load %arg3[%c0_10, %c0_11] : memref<1x32xf32, #tpu.memory_space<vmem>>, vector<1x32xf32>
      %cst_12 = arith.constant 0.000000e+00 : f32
      %16 = vector.broadcast %cst_12 : f32 to vector<1x32xf32>
      %17 = arith.subf %16, %15 : vector<1x32xf32>
      %18 = math.exp %17 : vector<1x32xf32>
      %cst_13 = arith.constant 1.000000e+00 : f32
      %19 = vector.broadcast %cst_13 : f32 to vector<1x32xf32>
      %20 = arith.addf %19, %18 : vector<1x32xf32>
      %cst_14 = arith.constant 1.000000e+00 : f32
      %21 = vector.broadcast %cst_14 : f32 to vector<1x32xf32>
      %22 = arith.divf %21, %20 : vector<1x32xf32>
      %c0_15 = arith.constant 0 : index
      %c0_16 = arith.constant 0 : index
      %23 = vector.load %arg3[%c0_15, %c0_16] : memref<1x32xf32, #tpu.memory_space<vmem>>, vector<1x32xf32>
      tpu.vector_store %arg3[%c0_15, %c0_16], %22 {strides = array<i32>} : memref<1x32xf32, #tpu.memory_space<vmem>>, vector<1x32xf32>,
    } else {
    }
    return
  }
  func.func @transform_0(%arg0: i32) -> (i32, i32) {
    %c0_i32 = arith.constant 0 : i32
    %c0_i32_0 = arith.constant 0 : i32
    return %arg0, %c0_i32 : i32, i32
  }
  func.func @transform_1(%arg0: i32) -> (i32, i32) {
    %c0_i32 = arith.constant 0 : i32
    %c0_i32_0 = arith.constant 0 : i32
    return %arg0, %c0_i32 : i32, i32
  }
  func.func @transform_2(%arg0: i32) -> (i32, i32) {
    %c0_i32 = arith.constant 0 : i32
    %c0_i32_0 = arith.constant 0 : i32
    %c0_i32_1 = arith.constant 0 : i32
    return %c0_i32, %c0_i32_0 : i32, i32
  }
}

</mosaic_0001>

<llo_original>
// kernel: gnet_forward.1
$region0: #{gnet_forward.1}
  #allocation0 [shape = 'u32[]', space=smem, size = 0x4, offset = 0x4, fixed_abs, tag = 'smem constant byte address 0x4 - core index']
  #allocation1 [shape = 'u32[144,128]{1,0:T(1,128)}', space=vmem, size = 0x12000, scoped, tag = 'internal scratch']
  %s0 = inlined_call_operand.hbm [shape: f32[8,32], index: 0, kind: input, shape index: {}]
  %s1 = inlined_call_operand.hbm [shape: f32[8,1], index: 1, kind: input, shape index: {}]
  %s2 = inlined_call_operand.hbm [shape: f32[1,32], index: 2, kind: output, shape index: {}]
  %s3 = sld [smem:[#allocation0]]
  $region34: #{gnet_forward.1} parent=0
    _
  %s5 = ssub.s32 1, %s3
  %s6 = scalar_select 0, %s5, %s3
  $region1: #{gnet_forward.1} parent=0
    #allocation2 [shape = 'u8[4096]{0}', space=vmem, size = 0x1000, scoped, tag = 'input window, operand 0, single buffered']
    #allocation3 [shape = 's32[1]{0}', space=sflag, size = 0x4, scoped, tag = 'scoped memory for gnet_forward.1']
    #allocation4 [shape = 's32[1]{0}', space=sflag, size = 0x4, scoped, tag = 'scoped memory for gnet_forward.1']
    #allocation5 [shape = 'u8[4096]{0}', space=vmem, size = 0x1000, scoped, tag = 'input window, operand 1, single buffered']
    #allocation6 [shape = 's32[1]{0}', space=sflag, size = 0x4, scoped, tag = 'scoped memory for gnet_forward.1']
    #allocation7 [shape = 'u8[512]{0}', space=vmem, size = 0x400, scoped, tag = 'output window, operand 0, single buffered']
    %7 = vsyncpa [#allocation3], 0
    %8 = vsyncpa [#allocation6], 0
    %9 = vsyncpa [#allocation4], 0
    // Predicated region
    $region2: #{gnet_forward.1} parent=1 // pred_check
      _
    $region3: #{gnet_forward.1} parent=1 // pred_check_branch
      %11 = sbr.rel (0) target = $region5
    $region4: #{gnet_forward.1} parent=1 // pred_region
      %s13 = ssub.s32 128, 128
      %14 = vsyncadd [#allocation3], %s13
      %s16 = sshll.u32 [#allocation2], 4
      %s17 = int_to_ptr.vmem [resolvable:$true] %s16
      %19 = dma.hbm_to_vmem [thread:$0]  %s0, 128, %s17, [#allocation3]
    $region5: #{gnet_forward.1} parent=1 // pred_fallthru
      _
    // Predicated region
    $region6: #{gnet_forward.1} parent=1 // pred_check
      _
    $region7: #{gnet_forward.1} parent=1 // pred_check_branch
      %21 = sbr.rel (0) target = $region9
    $region8: #{gnet_forward.1} parent=1 // pred_region
      %s23 = ssub.s32 128, 128
      %24 = vsyncadd [#allocation6], %s23
      %s26 = sshll.u32 [#allocation5], 4
      %s27 = int_to_ptr.vmem [resolvable:$true] %s26
      %29 = dma.hbm_to_vmem [thread:$0]  %s1, 128, %s27, [#allocation6]
    $region9: #{gnet_forward.1} parent=1 // pred_fallthru
      _
    // Predicated region
    $region10: #{gnet_forward.1} parent=1 // pred_check
      _
    $region11: #{gnet_forward.1} parent=1 // pred_check_branch
      %31 = sbr.rel (0) target = $region13
    $region12: #{gnet_forward.1} parent=1 // pred_region
      %32 = dma.done [#allocation3], 128
    $region13: #{gnet_forward.1} parent=1 // pred_fallthru
      _
    // Predicated region
    $region14: #{gnet_forward.1} parent=1 // pred_check
      _
    $region15: #{gnet_forward.1} parent=1 // pred_check_branch
      %34 = sbr.rel (0) target = $region17
    $region16: #{gnet_forward.1} parent=1 // pred_region
      %35 = dma.done [#allocation6], 128
    $region17: #{gnet_forward.1} parent=1 // pred_fallthru
      _
    %p36 = scmp.eq.s32.totalorder 0, 0
    // Predicated region
    $region18: #{gnet_forward.1} parent=1 // pred_check
      %p37 = pneg %p36
    $region19: #{gnet_forward.1} parent=1 // pred_check_branch
      %39 = sbr.rel (%p37) target = $region21
    $region20: #{gnet_forward.1} parent=1 // pred_region
      %vm40 = vcmask 253952
      %41 = vst.msk [vmem:[#allocation7] sm:$0x1] %vm40, 0.0
    $region21: #{gnet_forward.1} parent=1 // pred_fallthru
      _
    %v42 = vld [vmem:[#allocation2] sm:$0xff]
    %v43 = vld [vmem:[#allocation5] sm:$0xff]
    %v44 = vld [vmem:[#allocation7] sm:$0x1]
    %46 = vset.pattern.permute.xlu0 0
    %47 = vperm.xlu0 %46, %v43
    %v48 = vpop.permute.xlu0 %47
    %v50 = vmul.f32 %v48, %v42
    %vm51 = vcmask 261120
    %v52 = vsel %vm51, %v50, 0.0
    %v53 = vrot.slane %v52, 4
    %v54 = vadd.f32 %v52, %v53
    %v55 = vrot.slane %v54, 2
    %v56 = vadd.f32 %v54, %v55
    %v57 = vrot.slane %v56, 1
    %v58 = vadd.f32 %v56, %v57
    %v59 = vadd.f32 %v44, %v58
    %vm60 = vcmask 253952
    %61 = vst.msk [vmem:[#allocation7] sm:$0x1] %vm60, %v59
    // Predicated region
    $region22: #{gnet_forward.1} parent=1 // pred_check
      %p62 = pneg %p36
    $region23: #{gnet_forward.1} parent=1 // pred_check_branch
      %64 = sbr.rel (%p62) target = $region25
    $region24: #{gnet_forward.1} parent=1 // pred_region
      %v65 = vld [vmem:[#allocation7] sm:$0x1]
      %v66 = vsub.f32 0.0, %v65
      %v67 = vmul.f32 %v66, 1.442695
      %v68 = vpow.pop %v67
      %v69 = vadd.f32 %v68, 1.0
      %v70 = vrcp.pop %v69
      %v71 = vmul.f32 1.0, %v70
      %72 = vst.msk [vmem:[#allocation7] sm:$0x1] %vm60, %v71
    $region25: #{gnet_forward.1} parent=1 // pred_fallthru
      _
    // Predicated region
    $region26: #{gnet_forward.1} parent=1 // pred_check
      _
    $region27: #{gnet_forward.1} parent=1 // pred_check_branch
      %74 = sbr.rel (0) target = $region29
    $region28: #{gnet_forward.1} parent=1 // pred_region
      %s76 = ssub.s32 16, 16
      %77 = vsyncadd [#allocation4], %s76
      %s79 = sshll.u32 [#allocation7], 4
      %s80 = int_to_ptr.vmem [resolvable:$true] %s79
      %82 = dma.vmem_to_hbm [thread:$0]  %s80, 16, %s2, [#allocation4]
    $region29: #{gnet_forward.1} parent=1 // pred_fallthru
      _
    // Predicated region
    $region30: #{gnet_forward.1} parent=1 // pred_check
      _
    $region31: #{gnet_forward.1} parent=1 // pred_check_branch
      %84 = sbr.rel (0) target = $region33
    $region32: #{gnet_forward.1} parent=1 // pred_region
      %85 = dma.done [#allocation4], 16
    $region33: #{gnet_forward.1} parent=1 // pred_fallthru
      _
    %86 = vsyncpa [#allocation3], 1
    %87 = vsyncpa [#allocation6], 1
    %88 = vsyncpa [#allocation4], 1

</llo_original>
